<compile_context>
chip_gen: v7x
topology: tpu7x:2x2x1
jax: 0.10.0
libtpu: 0.0.40
codegen_flags: <defaults>
</compile_context>

<pallas_src>
import jax
import jax.numpy as jnp
from jax.experimental import pallas as pl
from jax.experimental.pallas import tpu as pltpu

IN_DIM = 49
HID_DIM = 98
OUT_DIM = 784              # 6*128 + 16 -> only 1 of 7 output vregs is a masked store
TILE_B_DEFAULT = 2048      # rows per grid step (amortizes per-step overhead)
NEG_SLOPE = 0.01


def decoder_kernel(x_ref, w2_ref, b2_ref, w3_ref, b3_ref, o_ref):
    # fc2: [TB, 49] @ [49, 98] + [1, 98]   (f32 accumulation on the MXU)
    h = jnp.dot(x_ref[...], w2_ref[...], preferred_element_type=jnp.float32)
    h = h + b2_ref[...]
    # leaky_relu (negative_slope = 0.01), f32 VPU math
    h = jnp.where(h > 0, h, NEG_SLOPE * h)
    # fc3: [TB, 98] @ [98, 784] + [1, 784]; bias folded into the store.
    o_ref[...] = (
        jnp.dot(h, w3_ref[...], preferred_element_type=jnp.float32) + b3_ref[...]
    ).astype(o_ref.dtype)


def _round_up(n, m):
    return -(-n // m) * m


def _choose_tile_b(B, tile_b):
    """Pick a batch tile: multiple of 8, capped by B, and (when the batch is
    big enough) small enough that the grid has >= 2 steps so the 'parallel'
    batch axis can shard across both TensorCores on v7x."""
    b8 = _round_up(B, 8)
    tile_b = max(8, min(tile_b, b8))
    if b8 > 8 and b8 <= tile_b:
        tile_b = _round_up(-(-b8 // 2), 8)   # ceil(b8/2), rounded to 8
    return tile_b


def decoder_forward(x, w2, b2, w3, b3, *, tile_b=TILE_B_DEFAULT,
                    out_dtype=jnp.float32):
    """x: [B, 49] f32 -> [B, 784] (f32 by default; bf16 optional)."""
    B, K = x.shape
    assert K == IN_DIM and w2.shape == (IN_DIM, HID_DIM)
    assert b2.shape == (1, HID_DIM)
    assert w3.shape == (HID_DIM, OUT_DIM) and b3.shape == (1, OUT_DIM)

    tile_b = _choose_tile_b(B, tile_b)
    Bp = _round_up(B, tile_b)
    xp = jnp.pad(x, ((0, Bp - B), (0, 0))) if Bp != B else x

    grid = (Bp // tile_b,)

    # Advisory cost hint for XLA's scheduler around the custom call.
    flops = 2 * Bp * (IN_DIM * HID_DIM + HID_DIM * OUT_DIM)
    bytes_accessed = (
        Bp * IN_DIM * 4                                   # x read
        + Bp * OUT_DIM * jnp.dtype(out_dtype).itemsize    # output write
        + (IN_DIM * HID_DIM + HID_DIM + HID_DIM * OUT_DIM + OUT_DIM) * 4
    )
    cost = pl.CostEstimate(flops=flops, transcendentals=0,
                           bytes_accessed=bytes_accessed)

    out = pl.pallas_call(
        decoder_kernel,
        out_shape=jax.ShapeDtypeStruct((Bp, OUT_DIM), out_dtype),
        grid=grid,
        in_specs=[
            pl.BlockSpec((tile_b, IN_DIM), lambda i: (i, 0)),    # x tile (pipelined)
            pl.BlockSpec((IN_DIM, HID_DIM), lambda i: (0, 0)),   # w2 resident
            pl.BlockSpec((1, HID_DIM), lambda i: (0, 0)),        # b2 resident
            pl.BlockSpec((HID_DIM, OUT_DIM), lambda i: (0, 0)),  # w3 resident
            pl.BlockSpec((1, OUT_DIM), lambda i: (0, 0)),        # b3 resident
        ],
        out_specs=pl.BlockSpec((tile_b, OUT_DIM), lambda i: (i, 0)),
        compiler_params=pltpu.CompilerParams(
            dimension_semantics=("parallel",),
            # Double-buffered 2048-row tiles (~14 MiB) exceed v5e's 16 MiB
            # default scoped VMEM; raise the limit (well under physical VMEM
            # on v5e/v6e/v7x).
            vmem_limit_bytes=48 << 20,
        ),
        cost_estimate=cost,
    )(xp, w2, b2, w3, b3)

    # Strip batch padding only (no column padding anymore).
    return out[:B] if Bp != B else out


def init_params(key):
    """Deterministic PyTorch-style init: U(-1/sqrt(fan_in), 1/sqrt(fan_in))."""
    k1, k2, k3, k4 = jax.random.split(key, 4)
    bound2 = 1.0 / jnp.sqrt(float(IN_DIM))
    bound3 = 1.0 / jnp.sqrt(float(HID_DIM))
    # Stored as [in, out] (transposed vs. torch's [out, in]) for row-major matmul.
    w2 = jax.random.uniform(k1, (IN_DIM, HID_DIM), jnp.float32, -bound2, bound2)
    b2 = jax.random.uniform(k2, (1, HID_DIM), jnp.float32, -bound2, bound2)
    w3 = jax.random.uniform(k3, (HID_DIM, OUT_DIM), jnp.float32, -bound3, bound3)
    b3 = jax.random.uniform(k4, (1, OUT_DIM), jnp.float32, -bound3, bound3)
    return w2, b2, w3, b3


def decoder_ref(x, w2, b2, w3, b3):
    h = x @ w2 + b2
    h = jnp.where(h > 0, h, NEG_SLOPE * h)
    return h @ w3 + b3


if __name__ == "__main__":
    key = jax.random.PRNGKey(0)
    kx, kp = jax.random.split(key)
    B = 8  # small demo batch; production callers should batch >= 2048 rows/call
    x = jax.random.normal(kx, (B, IN_DIM), jnp.float32)
    w2, b2, w3, b3 = init_params(kp)

    fwd = jax.jit(decoder_forward)
    out = jax.block_until_ready(fwd(x, w2, b2, w3, b3))

    ref = decoder_ref(x, w2, b2, w3, b3)
    assert out.shape == (B, OUT_DIM), out.shape
    assert jnp.allclose(out, ref, atol=1e-4, rtol=1e-4), "mismatch vs reference"
    print("KERNEL_OK")
</pallas_src>

<mosaic_0001>
module attributes {stable_mosaic.version = 11 : i64} {
  func.func @decoder_kernel(%arg0: i32, %arg1: memref<8x49xf32, #tpu.memory_space<vmem>>, %arg2: memref<49x98xf32, #tpu.memory_space<vmem>>, %arg3: memref<1x98xf32, #tpu.memory_space<vmem>>, %arg4: memref<98x784xf32, #tpu.memory_space<vmem>>, %arg5: memref<1x784xf32, #tpu.memory_space<vmem>>, %arg6: memref<8x784xf32, #tpu.memory_space<vmem>>) attributes {dimension_semantics = [#tpu.dimension_semantics<parallel>], iteration_bounds = array<i64: 1>, scalar_prefetch = 0 : i64, scratch_operands = 0 : i64, tpu.core_type = #tpu.core_type<tc>, window_params = [{transform_indices = @transform_0, window_bounds = array<i64: 8, 49>}, {pipeline_mode = #tpu.pipeline_mode<synchronous>, transform_indices = @transform_1, window_bounds = array<i64: 49, 98>}, {pipeline_mode = #tpu.pipeline_mode<synchronous>, transform_indices = @transform_2, window_bounds = array<i64: 1, 98>}, {pipeline_mode = #tpu.pipeline_mode<synchronous>, transform_indices = @transform_3, window_bounds = array<i64: 98, 784>}, {pipeline_mode = #tpu.pipeline_mode<synchronous>, transform_indices = @transform_4, window_bounds = array<i64: 1, 784>}, {transform_indices = @transform_5, window_bounds = array<i64: 8, 784>}]} {
    %c0 = arith.constant 0 : index
    %c0_0 = arith.constant 0 : index
    %0 = vector.load %arg1[%c0, %c0_0] : memref<8x49xf32, #tpu.memory_space<vmem>>, vector<8x49xf32>
    %c0_1 = arith.constant 0 : index
    %c0_2 = arith.constant 0 : index
    %1 = vector.load %arg2[%c0_1, %c0_2] : memref<49x98xf32, #tpu.memory_space<vmem>>, vector<49x98xf32>
    %cst = arith.constant dense<0.000000e+00> : vector<8x98xf32>
    %2 = tpu.matmul %0, %1, %cst {dimension_numbers = #tpu.dot_dimension_numbers<[1], [0], [0], [1], [0, 0, 1, 1], [], []>} : vector<8x49xf32>, vector<49x98xf32>, vector<8x98xf32> -> vector<8x98xf32>
    %c0_3 = arith.constant 0 : index
    %c0_4 = arith.constant 0 : index
    %3 = vector.load %arg3[%c0_3, %c0_4] : memref<1x98xf32, #tpu.memory_space<vmem>>, vector<1x98xf32>
    %4 = vector.broadcast %3 : vector<1x98xf32> to vector<8x98xf32>
    %5 = arith.addf %2, %4 : vector<8x98xf32>
    %cst_5 = arith.constant 0.000000e+00 : f32
    %6 = vector.broadcast %cst_5 : f32 to vector<8x98xf32>
    %7 = arith.cmpf ogt, %5, %6 : vector<8x98xf32>
    %cst_6 = arith.constant 0.00999999977 : f32
    %8 = vector.broadcast %cst_6 : f32 to vector<8x98xf32>
    %9 = arith.mulf %8, %5 : vector<8x98xf32>
    %10 = arith.select %7, %5, %9 : vector<8x98xi1>, vector<8x98xf32>
    %c0_7 = arith.constant 0 : index
    %c0_8 = arith.constant 0 : index
    %11 = vector.load %arg4[%c0_7, %c0_8] : memref<98x784xf32, #tpu.memory_space<vmem>>, vector<98x784xf32>
    %cst_9 = arith.constant dense<0.000000e+00> : vector<8x784xf32>
    %12 = tpu.matmul %10, %11, %cst_9 {dimension_numbers = #tpu.dot_dimension_numbers<[1], [0], [0], [1], [0, 0, 1, 1], [], []>} : vector<8x98xf32>, vector<98x784xf32>, vector<8x784xf32> -> vector<8x784xf32>
    %c0_10 = arith.constant 0 : index
    %c0_11 = arith.constant 0 : index
    %13 = vector.load %arg5[%c0_10, %c0_11] : memref<1x784xf32, #tpu.memory_space<vmem>>, vector<1x784xf32>
    %14 = vector.broadcast %13 : vector<1x784xf32> to vector<8x784xf32>
    %15 = arith.addf %12, %14 : vector<8x784xf32>
    %c0_12 = arith.constant 0 : index
    %c0_13 = arith.constant 0 : index
    %16 = vector.load %arg6[%c0_12, %c0_13] : memref<8x784xf32, #tpu.memory_space<vmem>>, vector<8x784xf32>
    tpu.vector_store %arg6[%c0_12, %c0_13], %15 {strides = array<i32>} : memref<8x784xf32, #tpu.memory_space<vmem>>, vector<8x784xf32>,
    return
  }
  func.func @transform_0(%arg0: i32) -> (i32, i32) {
    %c0_i32 = arith.constant 0 : i32
    %c0_i32_0 = arith.constant 0 : i32
    return %arg0, %c0_i32 : i32, i32
  }
  func.func @transform_1(%arg0: i32) -> (i32, i32) {
    %c0_i32 = arith.constant 0 : i32
    %c0_i32_0 = arith.constant 0 : i32
    %c0_i32_1 = arith.constant 0 : i32
    return %c0_i32, %c0_i32_0 : i32, i32
  }
  func.func @transform_2(%arg0: i32) -> (i32, i32) {
    %c0_i32 = arith.constant 0 : i32
    %c0_i32_0 = arith.constant 0 : i32
    %c0_i32_1 = arith.constant 0 : i32
    return %c0_i32, %c0_i32_0 : i32, i32
  }
  func.func @transform_3(%arg0: i32) -> (i32, i32) {
    %c0_i32 = arith.constant 0 : i32
    %c0_i32_0 = arith.constant 0 : i32
    %c0_i32_1 = arith.constant 0 : i32
    return %c0_i32, %c0_i32_0 : i32, i32
  }
  func.func @transform_4(%arg0: i32) -> (i32, i32) {
    %c0_i32 = arith.constant 0 : i32
    %c0_i32_0 = arith.constant 0 : i32
    %c0_i32_1 = arith.constant 0 : i32
    return %c0_i32, %c0_i32_0 : i32, i32
  }
  func.func @transform_5(%arg0: i32) -> (i32, i32) {
    %c0_i32 = arith.constant 0 : i32
    %c0_i32_0 = arith.constant 0 : i32
    return %arg0, %c0_i32 : i32, i32
  }
}

</mosaic_0001>

<llo_original>
// kernel: decoder_forward.1
$region0: #{decoder_forward.1}
  #allocation0 [shape = 'u32[]', space=smem, size = 0x4, offset = 0x4, fixed_abs, tag = 'smem constant byte address 0x4 - core index']
  #allocation1 [shape = 'u32[144,128]{1,0:T(1,128)}', space=vmem, size = 0x12000, scoped, tag = 'internal scratch']
  %s0 = inlined_call_operand.hbm [shape: f32[8,49], index: 0, kind: input, shape index: {}]
  %s1 = inlined_call_operand.hbm [shape: f32[49,98], index: 1, kind: input, shape index: {}]
  %s2 = inlined_call_operand.vmem [shape: f32[1,98], index: 2, kind: input, shape index: {}]
  %s3 = inlined_call_operand.hbm [shape: f32[98,784], index: 3, kind: input, shape index: {}]
  %s4 = inlined_call_operand.vmem [shape: f32[1,784], index: 4, kind: input, shape index: {}]
  %s5 = inlined_call_operand.hbm [shape: f32[8,784], index: 5, kind: output, shape index: {}]
  %s6 = sld [smem:[#allocation0]]
  $region42: #{decoder_forward.1} parent=0
    _
  %s8 = ssub.s32 1, %s6
  %s9 = scalar_select 0, %s8, %s6
  $region1: #{decoder_forward.1} parent=0
    #allocation2 [shape = 'u8[4096]{0}', space=vmem, size = 0x1000, scoped, tag = 'input window, operand 0, single buffered']
    #allocation3 [shape = 's32[1]{0}', space=sflag, size = 0x4, scoped, tag = 'scoped memory for decoder_forward.1']
    #allocation4 [shape = 's32[1]{0}', space=sflag, size = 0x4, scoped, tag = 'scoped memory for decoder_forward.1']
    #allocation5 [shape = 'u8[28672]{0}', space=vmem, size = 0x7000, scoped, tag = 'input window, operand 1, single buffered']
    #allocation6 [shape = 's32[1]{0}', space=sflag, size = 0x4, scoped, tag = 'scoped memory for decoder_forward.1']
    #allocation7 [shape = 'u8[372736]{0}', space=vmem, size = 0x5b000, scoped, tag = 'input window, operand 3, single buffered']
    #allocation8 [shape = 'u8[28672]{0}', space=vmem, size = 0x7000, scoped, tag = 'output window, operand 0, single buffered']
    %10 = vsyncpa [#allocation3], 0
    %11 = vsyncpa [#allocation6], 0
    %12 = vsyncpa [#allocation4], 0
    // Predicated region
    $region2: #{decoder_forward.1} parent=1 // pred_check
      _
    $region3: #{decoder_forward.1} parent=1 // pred_check_branch
      %14 = sbr.rel (0) target = $region5
    $region4: #{decoder_forward.1} parent=1 // pred_region
      %s16 = ssub.s32 128, 128
      %17 = vsyncadd [#allocation3], %s16
      %s19 = sshll.u32 [#allocation2], 4
      %s20 = int_to_ptr.vmem [resolvable:$true] %s19
      %22 = dma.hbm_to_vmem [thread:$0]  %s0, 128, %s20, [#allocation3]
    $region5: #{decoder_forward.1} parent=1 // pred_fallthru
      _
    // Predicated region
    $region6: #{decoder_forward.1} parent=1 // pred_check
      _
    $region7: #{decoder_forward.1} parent=1 // pred_check_branch
      %24 = sbr.rel (0) target = $region9
    $region8: #{decoder_forward.1} parent=1 // pred_region
      %s26 = ssub.s32 896, 896
      %27 = vsyncadd [#allocation6], %s26
      %s28 = sshll.u32 [#allocation5], 4
      %s29 = int_to_ptr.vmem [resolvable:$true] %s28
      %34 = dma.hbm_to_vmem [thread:$0]  %s1, 896, %s29, [#allocation6], 128, 128, 8
    $region9: #{decoder_forward.1} parent=1 // pred_fallthru
      _
    // Predicated region
    $region10: #{decoder_forward.1} parent=1 // pred_check
      _
    $region11: #{decoder_forward.1} parent=1 // pred_check_branch
      %36 = sbr.rel (0) target = $region13
    $region12: #{decoder_forward.1} parent=1 // pred_region
      _
    $region13: #{decoder_forward.1} parent=1 // pred_fallthru
      _
    // Predicated region
    $region14: #{decoder_forward.1} parent=1 // pred_check
      _
    $region15: #{decoder_forward.1} parent=1 // pred_check_branch
      %38 = sbr.rel (0) target = $region17
    $region16: #{decoder_forward.1} parent=1 // pred_region
      %s40 = ssub.s32 11648, 11648
      %41 = vsyncadd [#allocation6], %s40
      %s42 = sshll.u32 [#allocation7], 4
      %s43 = int_to_ptr.vmem [resolvable:$true] %s42
      %48 = dma.hbm_to_vmem [thread:$0]  %s3, 11648, %s43, [#allocation6], 896, 896, 56
    $region17: #{decoder_forward.1} parent=1 // pred_fallthru
      _
    // Predicated region
    $region18: #{decoder_forward.1} parent=1 // pred_check
      _
    $region19: #{decoder_forward.1} parent=1 // pred_check_branch
      %50 = sbr.rel (0) target = $region21
    $region20: #{decoder_forward.1} parent=1 // pred_region
      _
    $region21: #{decoder_forward.1} parent=1 // pred_fallthru
      _
    // Predicated region
    $region22: #{decoder_forward.1} parent=1 // pred_check
      _
    $region23: #{decoder_forward.1} parent=1 // pred_check_branch
      %52 = sbr.rel (0) target = $region25
    $region24: #{decoder_forward.1} parent=1 // pred_region
      %53 = dma.done [#allocation3], 128
    $region25: #{decoder_forward.1} parent=1 // pred_fallthru
      _
    // Predicated region
    $region26: #{decoder_forward.1} parent=1 // pred_check
      _
    $region27: #{decoder_forward.1} parent=1 // pred_check_branch
      %55 = sbr.rel (0) target = $region29
    $region28: #{decoder_forward.1} parent=1 // pred_region
      %56 = dma.done [#allocation6], 896
    $region29: #{decoder_forward.1} parent=1 // pred_fallthru
      _
    // Predicated region
    $region30: #{decoder_forward.1} parent=1 // pred_check
      _
    $region31: #{decoder_forward.1} parent=1 // pred_check_branch
      %58 = sbr.rel (0) target = $region33
    $region32: #{decoder_forward.1} parent=1 // pred_region
      %59 = dma.done [#allocation6], 11648
    $region33: #{decoder_forward.1} parent=1 // pred_fallthru
      _
    %v60 = vld [vmem:[#allocation2] sm:$0xff]
    %v61 = vld [vmem:[#allocation5] sm:$0xff]
    %v62 = vld [vmem:[#allocation5 + $0x8] sm:$0xff]
    %v63 = vld [vmem:[#allocation5 + $0x10] sm:$0xff]
    %v64 = vld [vmem:[#allocation5 + $0x18] sm:$0xff]
    %v65 = vld [vmem:[#allocation5 + $0x20] sm:$0xff]
    %v66 = vld [vmem:[#allocation5 + $0x28] sm:$0xff]
    %v67 = vld [vmem:[#allocation5 + $0x30] sm:$0x1]
    %v68 = vld [vmem:[%s2] sm:$0x1]
    %v70 = vlaneseq
    %v71 = vshrl.u32 %v70, 7
    %v72 = vsub.s32 0, %v71
    %v73 = vrot.slane %v68, %v72
    %vm75 = vcmask 400384
    %v77 = vsel %vm75, %v60, 0
    %vm79 = vcmask 1040384
    %v81 = vsel %vm79, %v67, 0
    %83 = vmatprep.subr.mxu0 0.0
    %84 = vmatpush1.msra.mxu0 %v61
    %85 = vmatprep.subr.mxu0 0.0
    %86 = vmatpush1.msra.mxu0 %v62
    %87 = vmatprep.subr.mxu0 0.0
    %88 = vmatpush1.msra.mxu0 %v63
    %89 = vmatprep.subr.mxu0 0.0
    %90 = vmatpush1.msra.mxu0 %v64
    %91 = vmatprep.subr.mxu0 0.0
    %92 = vmatpush1.msra.mxu0 %v65
    %93 = vmatprep.subr.mxu0 0.0
    %94 = vmatpush1.msra.mxu0 %v66
    %95 = vmatprep.subr.mxu0 0.0
    %96 = vmatpush1.msra.mxu0 %v81
    %97 = vmatprep.subr.mxu0 0.0
    %98 = vmatpush1.msra.mxu0 0.0
    %99 = vmatprep.subr.mxu0 0.0
    %100 = vmatpush1.msra.mxu0 0.0
    %101 = vmatprep.subr.mxu0 0.0
    %102 = vmatpush1.msra.mxu0 0.0
    %103 = vmatprep.subr.mxu0 0.0
    %104 = vmatpush1.msra.mxu0 0.0
    %105 = vmatprep.subr.mxu0 0.0
    %106 = vmatpush1.msra.mxu0 0.0
    %107 = vmatprep.subr.mxu0 0.0
    %108 = vmatpush1.msra.mxu0 0.0
    %109 = vmatprep.subr.mxu0 0.0
    %110 = vmatpush1.msra.mxu0 0.0
    %111 = vmatprep.subr.mxu0 0.0
    %112 = vmatpush1.msra.mxu0 0.0
    %113 = vmatprep.subr.mxu0 0.0
    %114 = vmatpush1.msra.mxu0 0.0
    %115 = vmatprep.subr.mxu0 0.0
    %116 = vmatpush1.msra.mxu0 0.0
    %117 = vmatprep.subr.mxu0 0.0
    %118 = vmatpush1.msra.mxu0 0.0
    %119 = vmatprep.subr.mxu0 0.0
    %120 = vmatpush1.msra.mxu0 0.0
    %121 = vmatprep.subr.mxu0 0.0
    %122 = vmatpush1.msra.mxu0 0.0
    %123 = vmatprep.subr.mxu0 0.0
    %124 = vmatpush1.msra.mxu0 0.0
    %125 = vmatprep.subr.mxu0 0.0
    %126 = vmatpush1.msra.mxu0 0.0
    %127 = vmatprep.subr.mxu0 0.0
    %128 = vmatpush1.msra.mxu0 0.0
    %129 = vmatprep.subr.mxu0 0.0
    %130 = vmatpush1.msra.mxu0 0.0
    %131 = vmatprep.subr.mxu0 0.0
    %132 = vmatpush1.msra.mxu0 0.0
    %133 = vmatprep.subr.mxu0 0.0
    %134 = vmatpush1.msra.mxu0 0.0
    %135 = vmatprep.subr.mxu0 0.0
    %136 = vmatpush1.msra.mxu0 0.0
    %137 = vmatprep.subr.mxu0 0.0
    %138 = vmatpush1.msra.mxu0 0.0
    %139 = vmatprep.subr.mxu0 0.0
    %140 = vmatpush1.msra.mxu0 0.0
    %141 = vmatprep.subr.mxu0 0.0
    %142 = vmatpush1.msra.mxu0 0.0
    %143 = vmatprep.subr.mxu0 0.0
    %144 = vmatpush1.msra.mxu0 0.0
    %145 = vmatprep.subr.mxu0 0.0
    %146 = vmatpush1.msra.mxu0 0.0
    %147 = vmatprep.mubr.f32.mxu0 0.0
    %148 = vmatmul.mubr.f32.gmra.mrb[0].mxu0 %v77
    %v149 = vpop.f32.mrb[0].mxu0
    %v150 = vadd.f32 %v73, %v149
    %v151 = vpop.f32.mrb[0].mxu0
    %152 = vdwg.mxu0
    %vm153 = vcmp.gt.f32.partialorder %v150, 0.0
    %v154 = vmul.f32 %v150, 0.01
    %v155 = vsel %vm153, %v150, %v154
    %v156 = vld [vmem:[#allocation7] sm:$0xff]
    %v157 = vld [vmem:[#allocation7 + $0x8] sm:$0xff]
    %v158 = vld [vmem:[#allocation7 + $0x10] sm:$0xff]
    %v159 = vld [vmem:[#allocation7 + $0x18] sm:$0xff]
    %v160 = vld [vmem:[#allocation7 + $0x20] sm:$0xff]
    %v161 = vld [vmem:[#allocation7 + $0x28] sm:$0xff]
    %v162 = vld [vmem:[#allocation7 + $0x30] sm:$0xff]
    %v163 = vld [vmem:[#allocation7 + $0x38] sm:$0xff]
    %v164 = vld [vmem:[#allocation7 + $0x40] sm:$0xff]
    %v165 = vld [vmem:[#allocation7 + $0x48] sm:$0xff]
    %v166 = vld [vmem:[#allocation7 + $0x50] sm:$0xff]
    %v167 = vld [vmem:[#allocation7 + $0x58] sm:$0xff]
    %v168 = vld [vmem:[#allocation7 + $0x60] sm:$0xff]
    %v169 = vld [vmem:[#allocation7 + $0x68] sm:$0xff]
    %v170 = vld [vmem:[#allocation7 + $0x70] sm:$0xff]
    %v171 = vld [vmem:[#allocation7 + $0x78] sm:$0xff]
    %v172 = vld [vmem:[#allocation7 + $0x80] sm:$0xff]
    %v173 = vld [vmem:[#allocation7 + $0x88] sm:$0xff]
    %v174 = vld [vmem:[#allocation7 + $0x90] sm:$0xff]
    %v175 = vld [vmem:[#allocation7 + $0x98] sm:$0xff]
    %v176 = vld [vmem:[#allocation7 + $0xa0] sm:$0xff]
    %v177 = vld [vmem:[#allocation7 + $0xa8] sm:$0xff]
    %v178 = vld [vmem:[#allocation7 + $0xb0] sm:$0xff]
    %v179 = vld [vmem:[#allocation7 + $0xb8] sm:$0xff]
    %v180 = vld [vmem:[#allocation7 + $0xc0] sm:$0xff]
    %v181 = vld [vmem:[#allocation7 + $0xc8] sm:$0xff]
    %v182 = vld [vmem:[#allocation7 + $0xd0] sm:$0xff]
    %v183 = vld [vmem:[#allocation7 + $0xd8] sm:$0xff]
    %v184 = vld [vmem:[#allocation7 + $0xe0] sm:$0xff]
    %v185 = vld [vmem:[#allocation7 + $0xe8] sm:$0xff]
    %v186 = vld [vmem:[#allocation7 + $0xf0] sm:$0xff]
    %v187 = vld [vmem:[#allocation7 + $0xf8] sm:$0xff]
    %v188 = vld [vmem:[#allocation7 + $0x100] sm:$0xff]
    %v189 = vld [vmem:[#allocation7 + $0x108] sm:$0xff]
    %v190 = vld [vmem:[#allocation7 + $0x110] sm:$0xff]
    %v191 = vld [vmem:[#allocation7 + $0x118] sm:$0xff]
    %v192 = vld [vmem:[#allocation7 + $0x120] sm:$0xff]
    %v193 = vld [vmem:[#allocation7 + $0x128] sm:$0xff]
    %v194 = vld [vmem:[#allocation7 + $0x130] sm:$0xff]
    %v195 = vld [vmem:[#allocation7 + $0x138] sm:$0xff]
    %v196 = vld [vmem:[#allocation7 + $0x140] sm:$0xff]
    %v197 = vld [vmem:[#allocation7 + $0x148] sm:$0xff]
    %v198 = vld [vmem:[#allocation7 + $0x150] sm:$0xff]
    %v199 = vld [vmem:[#allocation7 + $0x158] sm:$0xff]
    %v200 = vld [vmem:[#allocation7 + $0x160] sm:$0xff]
    %v201 = vld [vmem:[#allocation7 + $0x168] sm:$0xff]
    %v202 = vld [vmem:[#allocation7 + $0x170] sm:$0xff]
    %v203 = vld [vmem:[#allocation7 + $0x178] sm:$0xff]
    %v204 = vld [vmem:[#allocation7 + $0x180] sm:$0xff]
    %v205 = vld [vmem:[#allocation7 + $0x188] sm:$0xff]
    %v206 = vld [vmem:[#allocation7 + $0x190] sm:$0xff]
    %v207 = vld [vmem:[#allocation7 + $0x198] sm:$0xff]
    %v208 = vld [vmem:[#allocation7 + $0x1a0] sm:$0xff]
    %v209 = vld [vmem:[#allocation7 + $0x1a8] sm:$0xff]
    %v210 = vld [vmem:[#allocation7 + $0x1b0] sm:$0xff]
    %v211 = vld [vmem:[#allocation7 + $0x1b8] sm:$0xff]
    %v212 = vld [vmem:[#allocation7 + $0x1c0] sm:$0xff]
    %v213 = vld [vmem:[#allocation7 + $0x1c8] sm:$0xff]
    %v214 = vld [vmem:[#allocation7 + $0x1d0] sm:$0xff]
    %v215 = vld [vmem:[#allocation7 + $0x1d8] sm:$0xff]
    %v216 = vld [vmem:[#allocation7 + $0x1e0] sm:$0xff]
    %v217 = vld [vmem:[#allocation7 + $0x1e8] sm:$0xff]
    %v218 = vld [vmem:[#allocation7 + $0x1f0] sm:$0xff]
    %v219 = vld [vmem:[#allocation7 + $0x1f8] sm:$0xff]
    %v220 = vld [vmem:[#allocation7 + $0x200] sm:$0xff]
    %v221 = vld [vmem:[#allocation7 + $0x208] sm:$0xff]
    %v222 = vld [vmem:[#allocation7 + $0x210] sm:$0xff]
    %v223 = vld [vmem:[#allocation7 + $0x218] sm:$0xff]
    %v224 = vld [vmem:[#allocation7 + $0x220] sm:$0xff]
    %v225 = vld [vmem:[#allocation7 + $0x228] sm:$0xff]
    %v226 = vld [vmem:[#allocation7 + $0x230] sm:$0xff]
    %v227 = vld [vmem:[#allocation7 + $0x238] sm:$0xff]
    %v228 = vld [vmem:[#allocation7 + $0x240] sm:$0xff]
    %v229 = vld [vmem:[#allocation7 + $0x248] sm:$0xff]
    %v230 = vld [vmem:[#allocation7 + $0x250] sm:$0xff]
    %v231 = vld [vmem:[#allocation7 + $0x258] sm:$0xff]
    %v232 = vld [vmem:[#allocation7 + $0x260] sm:$0xff]
    %v233 = vld [vmem:[#allocation7 + $0x268] sm:$0xff]
    %v234 = vld [vmem:[#allocation7 + $0x270] sm:$0xff]
    %v235 = vld [vmem:[#allocation7 + $0x278] sm:$0xff]
    %v236 = vld [vmem:[#allocation7 + $0x280] sm:$0xff]
    %v237 = vld [vmem:[#allocation7 + $0x288] sm:$0xff]
    %v238 = vld [vmem:[#allocation7 + $0x290] sm:$0xff]
    %v239 = vld [vmem:[#allocation7 + $0x298] sm:$0xff]
    %v240 = vld [vmem:[#allocation7 + $0x2a0] sm:$0x3]
    %v241 = vld [vmem:[#allocation7 + $0x2a8] sm:$0x3]
    %v242 = vld [vmem:[#allocation7 + $0x2b0] sm:$0x3]
    %v243 = vld [vmem:[#allocation7 + $0x2b8] sm:$0x3]
    %v244 = vld [vmem:[#allocation7 + $0x2c0] sm:$0x3]
    %v245 = vld [vmem:[#allocation7 + $0x2c8] sm:$0x3]
    %v246 = vld [vmem:[#allocation7 + $0x2d0] sm:$0x3]
    %v247 = vld [vmem:[%s4] sm:$0x7f]
    %v249 = vlaneseq
    %v250 = vshrl.u32 %v249, 7
    %v251 = vsub.s32 0, %v250
    %v252 = vrot.slane %v247, %v251
    %v253 = vlaneseq
    %v254 = vshrl.u32 %v253, 7
    %v255 = vsub.s32 1, %v254
    %v256 = vrot.slane %v247, %v255
    %v257 = vlaneseq
    %v258 = vshrl.u32 %v257, 7
    %v259 = vsub.s32 2, %v258
    %v260 = vrot.slane %v247, %v259
    %v261 = vlaneseq
    %v262 = vshrl.u32 %v261, 7
    %v263 = vsub.s32 3, %v262
    %v264 = vrot.slane %v247, %v263
    %v265 = vlaneseq
    %v266 = vshrl.u32 %v265, 7
    %v267 = vsub.s32 4, %v266
    %v268 = vrot.slane %v247, %v267
    %v269 = vlaneseq
    %v270 = vshrl.u32 %v269, 7
    %v271 = vsub.s32 5, %v270
    %v272 = vrot.slane %v247, %v271
    %v273 = vlaneseq
    %v274 = vshrl.u32 %v273, 7
    %v275 = vsub.s32 6, %v274
    %v276 = vrot.slane %v247, %v275
    %vm284 = vcmask 801792
    %v286 = vsel %vm284, %v155, 0
    %vm288 = vcmask 1041408
    %v290 = vsel %vm288, %v240, 0
    %v293 = vsel %vm288, %v241, 0
    %v296 = vsel %vm288, %v242, 0
    %v299 = vsel %vm288, %v243, 0
    %v302 = vsel %vm288, %v244, 0
    %v305 = vsel %vm288, %v245, 0
    %v308 = vsel %vm288, %v246, 0
    %310 = vmatprep.subr.mxu0 %v157
    %311 = vmatpush1.msra.mxu0 %v156
    %312 = vmatprep.subr.mxu0 %v164
    %313 = vmatpush1.msra.mxu0 %v163
    %314 = vmatprep.subr.mxu0 %v171
    %315 = vmatpush1.msra.mxu0 %v170
    %316 = vmatprep.subr.mxu0 %v178
    %317 = vmatpush1.msra.mxu0 %v177
    %318 = vmatprep.subr.mxu0 %v185
    %319 = vmatpush1.msra.mxu0 %v184
    %320 = vmatprep.subr.mxu0 %v192
    %321 = vmatpush1.msra.mxu0 %v191
    %322 = vmatprep.subr.mxu0 %v199
    %323 = vmatpush1.msra.mxu0 %v198
    %324 = vmatprep.subr.mxu0 %v206
    %325 = vmatpush1.msra.mxu0 %v205
    %326 = vmatprep.subr.mxu0 %v213
    %327 = vmatpush1.msra.mxu0 %v212
    %328 = vmatprep.subr.mxu0 %v220
    %329 = vmatpush1.msra.mxu0 %v219
    %330 = vmatprep.subr.mxu0 %v227
    %331 = vmatpush1.msra.mxu0 %v226
    %332 = vmatprep.subr.mxu0 %v234
    %333 = vmatpush1.msra.mxu0 %v233
    %334 = vmatprep.subr.mxu0 %v293
    %335 = vmatpush1.msra.mxu0 %v290
    %336 = vmatprep.subr.mxu0 0.0
    %337 = vmatpush1.msra.mxu0 0.0
    %338 = vmatprep.subr.mxu0 0.0
    %339 = vmatpush1.msra.mxu0 0.0
    %340 = vmatprep.subr.mxu0 0.0
    %341 = vmatpush1.msra.mxu0 0.0
    %342 = vmatprep.subr.mxu0 0.0
    %343 = vmatpush1.msra.mxu0 0.0
    %344 = vmatprep.subr.mxu0 0.0
    %345 = vmatpush1.msra.mxu0 0.0
    %346 = vmatprep.subr.mxu0 0.0
    %347 = vmatpush1.msra.mxu0 0.0
    %348 = vmatprep.subr.mxu0 0.0
    %349 = vmatpush1.msra.mxu0 0.0
    %350 = vmatprep.subr.mxu0 0.0
    %351 = vmatpush1.msra.mxu0 0.0
    %352 = vmatprep.subr.mxu0 0.0
    %353 = vmatpush1.msra.mxu0 0.0
    %354 = vmatprep.subr.mxu0 0.0
    %355 = vmatpush1.msra.mxu0 0.0
    %356 = vmatprep.subr.mxu0 0.0
    %357 = vmatpush1.msra.mxu0 0.0
    %358 = vmatprep.subr.mxu0 0.0
    %359 = vmatpush1.msra.mxu0 0.0
    %360 = vmatprep.subr.mxu0 0.0
    %361 = vmatpush1.msra.mxu0 0.0
    %362 = vmatprep.subr.mxu0 0.0
    %363 = vmatpush1.msra.mxu0 0.0
    %364 = vmatprep.subr.mxu0 0.0
    %365 = vmatpush1.msra.mxu0 0.0
    %366 = vmatprep.subr.mxu0 0.0
    %367 = vmatpush1.msra.mxu0 0.0
    %368 = vmatprep.subr.mxu0 0.0
    %369 = vmatpush1.msra.mxu0 0.0
    %370 = vmatprep.subr.mxu0 0.0
    %371 = vmatpush1.msra.mxu0 0.0
    %372 = vmatprep.subr.mxu0 0.0
    %373 = vmatpush1.msra.mxu0 0.0
    %374 = vmatprep.mubr.f32.mxu0 0.0
    %375 = vmatmul.mubr.f32.gmra.mrb[0].mxu0 %v286
    %v376 = vpop.f32.mrb[0].mxu0
    %v377 = vadd.f32 %v252, %v376
    %v378 = vpop.f32.mrb[0].mxu0
    %v379 = vadd.f32 %v256, %v378
    %380 = vdwg.mxu0
    %381 = vmatprep.subr.mxu0 %v159
    %382 = vmatpush1.msra.mxu0 %v158
    %383 = vmatprep.subr.mxu0 %v166
    %384 = vmatpush1.msra.mxu0 %v165
    %385 = vmatprep.subr.mxu0 %v173
    %386 = vmatpush1.msra.mxu0 %v172
    %387 = vmatprep.subr.mxu0 %v180
    %388 = vmatpush1.msra.mxu0 %v179
    %389 = vmatprep.subr.mxu0 %v187
    %390 = vmatpush1.msra.mxu0 %v186
    %391 = vmatprep.subr.mxu0 %v194
    %392 = vmatpush1.msra.mxu0 %v193
    %393 = vmatprep.subr.mxu0 %v201
    %394 = vmatpush1.msra.mxu0 %v200
    %395 = vmatprep.subr.mxu0 %v208
    %396 = vmatpush1.msra.mxu0 %v207
    %397 = vmatprep.subr.mxu0 %v215
    %398 = vmatpush1.msra.mxu0 %v214
    %399 = vmatprep.subr.mxu0 %v222
    %400 = vmatpush1.msra.mxu0 %v221
    %401 = vmatprep.subr.mxu0 %v229
    %402 = vmatpush1.msra.mxu0 %v228
    %403 = vmatprep.subr.mxu0 %v236
    %404 = vmatpush1.msra.mxu0 %v235
    %405 = vmatprep.subr.mxu0 %v299
    %406 = vmatpush1.msra.mxu0 %v296
    %407 = vmatprep.subr.mxu0 0.0
    %408 = vmatpush1.msra.mxu0 0.0
    %409 = vmatprep.subr.mxu0 0.0
    %410 = vmatpush1.msra.mxu0 0.0
    %411 = vmatprep.subr.mxu0 0.0
    %412 = vmatpush1.msra.mxu0 0.0
    %413 = vmatprep.subr.mxu0 0.0
    %414 = vmatpush1.msra.mxu0 0.0
    %415 = vmatprep.subr.mxu0 0.0
    %416 = vmatpush1.msra.mxu0 0.0
    %417 = vmatprep.subr.mxu0 0.0
    %418 = vmatpush1.msra.mxu0 0.0
    %419 = vmatprep.subr.mxu0 0.0
    %420 = vmatpush1.msra.mxu0 0.0
    %421 = vmatprep.subr.mxu0 0.0
    %422 = vmatpush1.msra.mxu0 0.0
    %423 = vmatprep.subr.mxu0 0.0
    %424 = vmatpush1.msra.mxu0 0.0
    %425 = vmatprep.subr.mxu0 0.0
    %426 = vmatpush1.msra.mxu0 0.0
    %427 = vmatprep.subr.mxu0 0.0
    %428 = vmatpush1.msra.mxu0 0.0
    %429 = vmatprep.subr.mxu0 0.0
    %430 = vmatpush1.msra.mxu0 0.0
    %431 = vmatprep.subr.mxu0 0.0
    %432 = vmatpush1.msra.mxu0 0.0
    %433 = vmatprep.subr.mxu0 0.0
    %434 = vmatpush1.msra.mxu0 0.0
    %435 = vmatprep.subr.mxu0 0.0
    %436 = vmatpush1.msra.mxu0 0.0
    %437 = vmatprep.subr.mxu0 0.0
    %438 = vmatpush1.msra.mxu0 0.0
    %439 = vmatprep.subr.mxu0 0.0
    %440 = vmatpush1.msra.mxu0 0.0
    %441 = vmatprep.subr.mxu0 0.0
    %442 = vmatpush1.msra.mxu0 0.0
    %443 = vmatprep.subr.mxu0 0.0
    %444 = vmatpush1.msra.mxu0 0.0
    %445 = vmatprep.mubr.f32.mxu0 0.0
    %446 = vmatmul.mubr.f32.gmra.mrb[0].mxu0 %v286
    %v447 = vpop.f32.mrb[0].mxu0
    %v448 = vadd.f32 %v260, %v447
    %v449 = vpop.f32.mrb[0].mxu0
    %v450 = vadd.f32 %v264, %v449
    %451 = vdwg.mxu0
    %452 = vmatprep.subr.mxu0 %v161
    %453 = vmatpush1.msra.mxu0 %v160
    %454 = vmatprep.subr.mxu0 %v168
    %455 = vmatpush1.msra.mxu0 %v167
    %456 = vmatprep.subr.mxu0 %v175
    %457 = vmatpush1.msra.mxu0 %v174
    %458 = vmatprep.subr.mxu0 %v182
    %459 = vmatpush1.msra.mxu0 %v181
    %460 = vmatprep.subr.mxu0 %v189
    %461 = vmatpush1.msra.mxu0 %v188
    %462 = vmatprep.subr.mxu0 %v196
    %463 = vmatpush1.msra.mxu0 %v195
    %464 = vmatprep.subr.mxu0 %v203
    %465 = vmatpush1.msra.mxu0 %v202
    %466 = vmatprep.subr.mxu0 %v210
    %467 = vmatpush1.msra.mxu0 %v209
    %468 = vmatprep.subr.mxu0 %v217
    %469 = vmatpush1.msra.mxu0 %v216
    %470 = vmatprep.subr.mxu0 %v224
    %471 = vmatpush1.msra.mxu0 %v223
    %472 = vmatprep.subr.mxu0 %v231
    %473 = vmatpush1.msra.mxu0 %v230
    %474 = vmatprep.subr.mxu0 %v238
    %475 = vmatpush1.msra.mxu0 %v237
    %476 = vmatprep.subr.mxu0 %v305
    %477 = vmatpush1.msra.mxu0 %v302
    %478 = vmatprep.subr.mxu0 0.0
    %479 = vmatpush1.msra.mxu0 0.0
    %480 = vmatprep.subr.mxu0 0.0
    %481 = vmatpush1.msra.mxu0 0.0
    %482 = vmatprep.subr.mxu0 0.0
    %483 = vmatpush1.msra.mxu0 0.0
    %484 = vmatprep.subr.mxu0 0.0
    %485 = vmatpush1.msra.mxu0 0.0
    %486 = vmatprep.subr.mxu0 0.0
    %487 = vmatpush1.msra.mxu0 0.0
    %488 = vmatprep.subr.mxu0 0.0
    %489 = vmatpush1.msra.mxu0 0.0
    %490 = vmatprep.subr.mxu0 0.0
    %491 = vmatpush1.msra.mxu0 0.0
    %492 = vmatprep.subr.mxu0 0.0
    %493 = vmatpush1.msra.mxu0 0.0
    %494 = vmatprep.subr.mxu0 0.0
    %495 = vmatpush1.msra.mxu0 0.0
    %496 = vmatprep.subr.mxu0 0.0
    %497 = vmatpush1.msra.mxu0 0.0
    %498 = vmatprep.subr.mxu0 0.0
    %499 = vmatpush1.msra.mxu0 0.0
    %500 = vmatprep.subr.mxu0 0.0
    %501 = vmatpush1.msra.mxu0 0.0
    %502 = vmatprep.subr.mxu0 0.0
    %503 = vmatpush1.msra.mxu0 0.0
    %504 = vmatprep.subr.mxu0 0.0
    %505 = vmatpush1.msra.mxu0 0.0
    %506 = vmatprep.subr.mxu0 0.0
    %507 = vmatpush1.msra.mxu0 0.0
    %508 = vmatprep.subr.mxu0 0.0
    %509 = vmatpush1.msra.mxu0 0.0
    %510 = vmatprep.subr.mxu0 0.0
    %511 = vmatpush1.msra.mxu0 0.0
    %512 = vmatprep.subr.mxu0 0.0
    %513 = vmatpush1.msra.mxu0 0.0
    %514 = vmatprep.subr.mxu0 0.0
    %515 = vmatpush1.msra.mxu0 0.0
    %516 = vmatprep.mubr.f32.mxu0 0.0
    %517 = vmatmul.mubr.f32.gmra.mrb[0].mxu0 %v286
    %v518 = vpop.f32.mrb[0].mxu0
    %v519 = vadd.f32 %v268, %v518
    %v520 = vpop.f32.mrb[0].mxu0
    %v521 = vadd.f32 %v272, %v520
    %522 = vdwg.mxu0
    %523 = vmatprep.subr.mxu0 0.0
    %524 = vmatpush1.msra.mxu0 %v162
    %525 = vmatprep.subr.mxu0 0.0
    %526 = vmatpush1.msra.mxu0 %v169
    %527 = vmatprep.subr.mxu0 0.0
    %528 = vmatpush1.msra.mxu0 %v176
    %529 = vmatprep.subr.mxu0 0.0
    %530 = vmatpush1.msra.mxu0 %v183
    %531 = vmatprep.subr.mxu0 0.0
    %532 = vmatpush1.msra.mxu0 %v190
    %533 = vmatprep.subr.mxu0 0.0
    %534 = vmatpush1.msra.mxu0 %v197
    %535 = vmatprep.subr.mxu0 0.0
    %536 = vmatpush1.msra.mxu0 %v204
    %537 = vmatprep.subr.mxu0 0.0
    %538 = vmatpush1.msra.mxu0 %v211
    %539 = vmatprep.subr.mxu0 0.0
    %540 = vmatpush1.msra.mxu0 %v218
    %541 = vmatprep.subr.mxu0 0.0
    %542 = vmatpush1.msra.mxu0 %v225
    %543 = vmatprep.subr.mxu0 0.0
    %544 = vmatpush1.msra.mxu0 %v232
    %545 = vmatprep.subr.mxu0 0.0
    %546 = vmatpush1.msra.mxu0 %v239
    %547 = vmatprep.subr.mxu0 0.0
    %548 = vmatpush1.msra.mxu0 %v308
    %549 = vmatprep.subr.mxu0 0.0
    %550 = vmatpush1.msra.mxu0 0.0
    %551 = vmatprep.subr.mxu0 0.0
    %552 = vmatpush1.msra.mxu0 0.0
    %553 = vmatprep.subr.mxu0 0.0
    %554 = vmatpush1.msra.mxu0 0.0
    %555 = vmatprep.subr.mxu0 0.0
    %556 = vmatpush1.msra.mxu0 0.0
    %557 = vmatprep.subr.mxu0 0.0
    %558 = vmatpush1.msra.mxu0 0.0
    %559 = vmatprep.subr.mxu0 0.0
    %560 = vmatpush1.msra.mxu0 0.0
    %561 = vmatprep.subr.mxu0 0.0
    %562 = vmatpush1.msra.mxu0 0.0
    %563 = vmatprep.subr.mxu0 0.0
    %564 = vmatpush1.msra.mxu0 0.0
    %565 = vmatprep.subr.mxu0 0.0
    %566 = vmatpush1.msra.mxu0 0.0
    %567 = vmatprep.subr.mxu0 0.0
    %568 = vmatpush1.msra.mxu0 0.0
    %569 = vmatprep.subr.mxu0 0.0
    %570 = vmatpush1.msra.mxu0 0.0
    %571 = vmatprep.subr.mxu0 0.0
    %572 = vmatpush1.msra.mxu0 0.0
    %573 = vmatprep.subr.mxu0 0.0
    %574 = vmatpush1.msra.mxu0 0.0
    %575 = vmatprep.subr.mxu0 0.0
    %576 = vmatpush1.msra.mxu0 0.0
    %577 = vmatprep.subr.mxu0 0.0
    %578 = vmatpush1.msra.mxu0 0.0
    %579 = vmatprep.subr.mxu0 0.0
    %580 = vmatpush1.msra.mxu0 0.0
    %581 = vmatprep.subr.mxu0 0.0
    %582 = vmatpush1.msra.mxu0 0.0
    %583 = vmatprep.subr.mxu0 0.0
    %584 = vmatpush1.msra.mxu0 0.0
    %585 = vmatprep.subr.mxu0 0.0
    %586 = vmatpush1.msra.mxu0 0.0
    %587 = vmatprep.mubr.f32.mxu0 0.0
    %588 = vmatmul.mubr.f32.gmra.mrb[0].mxu0 %v286
    %v589 = vpop.f32.mrb[0].mxu0
    %v590 = vadd.f32 %v276, %v589
    %v591 = vpop.f32.mrb[0].mxu0
    %592 = vdwg.mxu0
    %593 = vst [vmem:[#allocation8] sm:$0xff] %v377
    %594 = vst [vmem:[#allocation8 + $0x8] sm:$0xff] %v379
    %595 = vst [vmem:[#allocation8 + $0x10] sm:$0xff] %v448
    %596 = vst [vmem:[#allocation8 + $0x18] sm:$0xff] %v450
    %597 = vst [vmem:[#allocation8 + $0x20] sm:$0xff] %v519
    %598 = vst [vmem:[#allocation8 + $0x28] sm:$0xff] %v521
    %vm599 = vcmask 130048
    %600 = vst.msk [vmem:[#allocation8 + $0x30] sm:$0xff] %vm599, %v590
    // Predicated region
    $region34: #{decoder_forward.1} parent=1 // pred_check
      _
    $region35: #{decoder_forward.1} parent=1 // pred_check_branch
      %602 = sbr.rel (0) target = $region37
    $region36: #{decoder_forward.1} parent=1 // pred_region
      %s604 = ssub.s32 896, 896
      %605 = vsyncadd [#allocation4], %s604
      %s607 = sshll.u32 [#allocation8], 4
      %s608 = int_to_ptr.vmem [resolvable:$true] %s607
      %610 = dma.vmem_to_hbm [thread:$0]  %s608, 896, %s5, [#allocation4]
    $region37: #{decoder_forward.1} parent=1 // pred_fallthru
      _
    // Predicated region
    $region38: #{decoder_forward.1} parent=1 // pred_check
      _
    $region39: #{decoder_forward.1} parent=1 // pred_check_branch
      %612 = sbr.rel (0) target = $region41
    $region40: #{decoder_forward.1} parent=1 // pred_region
      %613 = dma.done [#allocation4], 896
    $region41: #{decoder_forward.1} parent=1 // pred_fallthru
      _
    %614 = vsyncpa [#allocation3], 1
    %615 = vsyncpa [#allocation6], 1
    %616 = vsyncpa [#allocation4], 1

</llo_original>
